<compile_context>
chip_gen: v6e
topology: v6e:2x2x1
jax: 0.10.0
libtpu: 0.0.40
codegen_flags: <defaults>
</compile_context>

<pallas_src>
import jax
import jax.numpy as jnp
from jax.experimental import pallas as pl
from jax.experimental.pallas import tpu as pltpu


LANES = 128            # TPU lane width; class and hidden axes are padded to this.
DEFAULT_TM = 2048      # target row tile (tokens per grid step); multiple of 16.
MIN_GRID_STEPS = 2     # keep >=2 row tiles so v7x's two TensorCores both engage.


def _round_up(n: int, m: int) -> int:
    return ((n + m - 1) // m) * m


def _cdiv(a: int, b: int) -> int:
    return (a + b - 1) // b


def _big_negative(dtype) -> float:
    """Dtype-aware large-negative logit bias for padded classes."""
    return float(jnp.finfo(dtype).min) / 2


def ner_kernel(x_ref, w1_ref, b1_ref, w2_ref, b2_ref, o_ref):
    """One (TM, nI) tile of tokens -> (TM, nO_pad) tile of tag probabilities."""
    # In-kernel f32 -> bf16 cast of the streamed activations (VPU has slack;
    # avoids an extra full HBM pass in the wrapper).
    x = x_ref[...].astype(w1_ref.dtype)

    # Hidden layer: Linear + ReLU.  bf16 x bf16 on the MXU, f32 accumulation.
    # nH is lane-padded to 128; padded columns are exactly 0 after ReLU.
    h = jnp.dot(x, w1_ref[...], preferred_element_type=jnp.float32)
    h = jnp.maximum(h + b1_ref[...], 0.0)          # b1 is (1, nH_pad), broadcast
    # input_dropout (Dropout2d): identity at inference.

    # Output layer: Linear (padded hidden rows / class columns are zero).
    logits = jnp.dot(h.astype(w2_ref.dtype), w2_ref[...],
                     preferred_element_type=jnp.float32)
    logits = logits + b2_ref[...]                  # padded class biases ~ -finfo.max/2
    # output_dropout (Dropout2d): identity at inference.

    # Softmax over the class axis (dim=1).  Padded columns -> exp(-huge) = 0.
    # Exact division: the kernel is DMA-bound, approx reciprocal buys nothing.
    m = jnp.max(logits, axis=1, keepdims=True)
    e = jnp.exp(logits - m)
    denom = jnp.sum(e, axis=1, keepdims=True)
    o_ref[...] = (e / denom).astype(o_ref.dtype)


def prepare_params(w1, b1, w2, b2, *, param_dtype=jnp.bfloat16):
    """One-time preprocessing of PyTorch-layout weights.

    w1: (nH, nI)  b1: (nH,)  w2: (nO, nH)  b2: (nO,)
    Weights are transposed to [in, out], cast to bf16, and both the hidden and
    class axes are zero-padded to a multiple of 128 lanes so every in-kernel
    tensor is lane-dense.  Padded class biases get a large negative value so
    those classes carry ~0 probability.  Returns
        (w1_t, b1_2d, w2_pad, b2_pad, nO).
    """
    nH, nI = w1.shape
    nO = w2.shape[0]
    nH_pad = _round_up(nH, LANES)
    nO_pad = _round_up(nO, LANES)

    # (nI, nH_pad): padded hidden columns have zero weight.
    w1_t = jnp.zeros((nI, nH_pad), param_dtype)
    w1_t = w1_t.at[:, :nH].set(jnp.transpose(w1).astype(param_dtype))
    # (1, nH_pad): padded hidden biases are zero -> ReLU(0+0)=0, exact.
    b1_2d = jnp.zeros((1, nH_pad), jnp.float32)
    b1_2d = b1_2d.at[0, :nH].set(b1.astype(jnp.float32))

    # (nH_pad, nO_pad): padded hidden rows and padded class columns are zero.
    w2_pad = jnp.zeros((nH_pad, nO_pad), param_dtype)
    w2_pad = w2_pad.at[:nH, :nO].set(jnp.transpose(w2).astype(param_dtype))
    # (1, nO_pad): padded class biases get a dtype-aware huge negative value.
    b2_pad = jnp.full((1, nO_pad), _big_negative(jnp.float32), jnp.float32)
    b2_pad = b2_pad.at[0, :nO].set(b2.astype(jnp.float32))

    return w1_t, b1_2d, w2_pad, b2_pad, nO


def ner_forward(x, params, *, tm=DEFAULT_TM, out_dtype=jnp.bfloat16):
    """x: (M, nI) float32.  params from prepare_params.

    Returns the *padded* probability array of shape (m_pad, nO_pad) in
    `out_dtype` (default bf16 -- halves the dominant output HBM stream).
    Real probabilities live in [:M, :nO]; padded classes are ~0 and padded
    rows are discardable.  The consumer should index lazily rather than
    materializing a sliced copy.
    """
    w1_t, b1_2d, w2_p, b2_p, _n_out = params
    M, nI = x.shape
    nH_pad = w1_t.shape[1]
    nO_pad = w2_p.shape[1]

    # Row tiling: largest tile <= tm that still gives >= MIN_GRID_STEPS grid
    # steps (so both v7x TensorCores get work), rounded to a multiple of 16
    # (bf16 output sublane packing).  Because tm ~= ceil(M / n_steps), the
    # row padding is < 16 * n_steps and is usually zero -> no jnp.pad copy.
    n_steps = max(MIN_GRID_STEPS, _cdiv(M, max(tm, 16)))
    tm = max(_round_up(_cdiv(M, n_steps), 16), 16)
    m_pad = _round_up(M, tm)
    if m_pad != M:
        # Rarely taken (only when M is not a multiple of 16*n_steps).
        x = jnp.pad(x, ((0, m_pad - M), (0, 0)))
    grid = (m_pad // tm,)

    out_bytes = jnp.dtype(out_dtype).itemsize
    bytes_accessed = (
        m_pad * nI * x.dtype.itemsize        # x streamed as-is (f32)
        + m_pad * nO_pad * out_bytes         # output (bf16 by default)
        + (w1_t.size + w2_p.size) * 2        # weights (bf16, VMEM-resident)
        + (b1_2d.size + b2_p.size) * 4       # biases (f32, VMEM-resident)
    )

    # NOTE: pipeline_mode=pl.Buffered(1) on the four resident operands would
    # drop their spare double-buffer on v7x's 64 MiB VMEM; skipped here since
    # the resident weights total < 100 KiB at these widths.
    out = pl.pallas_call(
        ner_kernel,
        out_shape=jax.ShapeDtypeStruct((m_pad, nO_pad), out_dtype),
        grid=grid,
        in_specs=[
            pl.BlockSpec((tm, nI), lambda i: (i, 0)),        # x: streamed row tiles
            pl.BlockSpec((nI, nH_pad), lambda i: (0, 0)),    # w1: VMEM-resident
            pl.BlockSpec((1, nH_pad), lambda i: (0, 0)),     # b1: VMEM-resident
            pl.BlockSpec((nH_pad, nO_pad), lambda i: (0, 0)),  # w2: VMEM-resident
            pl.BlockSpec((1, nO_pad), lambda i: (0, 0)),     # b2: VMEM-resident
        ],
        out_specs=pl.BlockSpec((tm, nO_pad), lambda i: (i, 0)),
        compiler_params=pltpu.CompilerParams(
            dimension_semantics=("parallel",),               # shard row tiles across TCs
            vmem_limit_bytes=32 * 1024 * 1024,               # safe on v5e/v6e/v7x
        ),
        cost_estimate=pl.CostEstimate(
            flops=2 * m_pad * (nI * nH_pad + nH_pad * nO_pad),
            transcendentals=m_pad * nO_pad,
            bytes_accessed=int(bytes_accessed),
        ),
    )(x, w1_t, b1_2d, w2_p, b2_p)

    return out


def reference_forward(x, w1, b1, w2, b2):
    """Pure-JAX reference applying the same bf16 casts as the kernel."""
    xb = x.astype(jnp.bfloat16).astype(jnp.float32)
    w1b = w1.astype(jnp.bfloat16).astype(jnp.float32)
    w2b = w2.astype(jnp.bfloat16).astype(jnp.float32)
    h = jnp.maximum(xb @ w1b.T + b1, 0.0)
    h = h.astype(jnp.bfloat16).astype(jnp.float32)
    logits = h @ w2b.T + b2
    return jax.nn.softmax(logits, axis=1)


if __name__ == "__main__":
    # Small shapes consistent with the module: M tokens from the tok2vec layer,
    # nI input width, nH hidden width, nO NER tag count.
    M, nI, nH, nO = 256, 64, 64, 18
    key = jax.random.PRNGKey(0)
    kx, k1, k2, k3, k4 = jax.random.split(key, 5)

    x = jax.random.normal(kx, (M, nI), dtype=jnp.float32)

    # Deterministic PyTorch-Linear-style init: uniform(-1/sqrt(fan_in), 1/sqrt(fan_in)).
    bound1 = 1.0 / (nI ** 0.5)
    w1 = jax.random.uniform(k1, (nH, nI), jnp.float32, -bound1, bound1)
    b1 = jax.random.uniform(k2, (nH,), jnp.float32, -bound1, bound1)
    bound2 = 1.0 / (nH ** 0.5)
    w2 = jax.random.uniform(k3, (nO, nH), jnp.float32, -bound2, bound2)
    b2 = jax.random.uniform(k4, (nO,), jnp.float32, -bound2, bound2)

    # One-time parameter preprocessing (transpose / bf16 cast / lane padding).
    params = prepare_params(w1, b1, w2, b2)

    # Kernel returns the lane/row-padded bf16 probability slab; consumers index
    # [:M, :nO] lazily (no extra full-output slice pass on the hot path).
    out_padded = ner_forward(x, params)
    out_padded = jax.block_until_ready(out_padded)

    assert out_padded.dtype == jnp.bfloat16
    assert out_padded.shape[0] >= M and out_padded.shape[1] % LANES == 0

    # Test-only trim + upcast for comparison against the f32 reference.
    probs = jnp.asarray(out_padded[:M, :nO], jnp.float32)
    ref = reference_forward(x, w1, b1, w2, b2)

    assert probs.shape == (M, nO)
    # bf16 streaming + bf16 output -> compare with a tolerant bound.
    assert jnp.allclose(probs, ref, atol=2e-2, rtol=2e-2), "mismatch vs reference"
    # softmax rows sum to ~1 (bf16 quantization allows tiny drift).
    assert jnp.allclose(jnp.sum(probs, axis=1), jnp.ones((M,)), atol=2e-2)
    # padded classes carry ~0 probability.
    assert float(jnp.max(jnp.asarray(out_padded[:M, nO:], jnp.float32))) < 1e-3

    print("KERNEL_OK")
</pallas_src>

<mosaic_0001>
module attributes {stable_mosaic.version = 11 : i64} {
  func.func @ner_kernel(%arg0: i32, %arg1: memref<128x64xf32, #tpu.memory_space<vmem>>, %arg2: memref<64x128xbf16, #tpu.memory_space<vmem>>, %arg3: memref<1x128xf32, #tpu.memory_space<vmem>>, %arg4: memref<128x128xbf16, #tpu.memory_space<vmem>>, %arg5: memref<1x128xf32, #tpu.memory_space<vmem>>, %arg6: memref<128x128xbf16, #tpu.memory_space<vmem>>) attributes {dimension_semantics = [#tpu.dimension_semantics<parallel>], iteration_bounds = array<i64: 2>, scalar_prefetch = 0 : i64, scratch_operands = 0 : i64, tpu.core_type = #tpu.core_type<tc>, window_params = [{transform_indices = @transform_0, window_bounds = array<i64: 128, 64>}, {pipeline_mode = #tpu.pipeline_mode<synchronous>, transform_indices = @transform_1, window_bounds = array<i64: 64, 128>}, {pipeline_mode = #tpu.pipeline_mode<synchronous>, transform_indices = @transform_2, window_bounds = array<i64: 1, 128>}, {pipeline_mode = #tpu.pipeline_mode<synchronous>, transform_indices = @transform_3, window_bounds = array<i64: 128, 128>}, {pipeline_mode = #tpu.pipeline_mode<synchronous>, transform_indices = @transform_4, window_bounds = array<i64: 1, 128>}, {transform_indices = @transform_5, window_bounds = array<i64: 128, 128>}]} {
    %c0 = arith.constant 0 : index
    %c0_0 = arith.constant 0 : index
    %0 = vector.load %arg1[%c0, %c0_0] : memref<128x64xf32, #tpu.memory_space<vmem>>, vector<128x64xf32>
    %1 = arith.truncf %0 : vector<128x64xf32> to vector<128x64xbf16>
    %c0_1 = arith.constant 0 : index
    %c0_2 = arith.constant 0 : index
    %2 = vector.load %arg2[%c0_1, %c0_2] : memref<64x128xbf16, #tpu.memory_space<vmem>>, vector<64x128xbf16>
    %cst = arith.constant dense<0.000000e+00> : vector<128x128xf32>
    %3 = tpu.matmul %1, %2, %cst {dimension_numbers = #tpu.dot_dimension_numbers<[1], [0], [0], [1], [0, 0, 1, 1], [], []>} : vector<128x64xbf16>, vector<64x128xbf16>, vector<128x128xf32> -> vector<128x128xf32>
    %c0_3 = arith.constant 0 : index
    %c0_4 = arith.constant 0 : index
    %4 = vector.load %arg3[%c0_3, %c0_4] : memref<1x128xf32, #tpu.memory_space<vmem>>, vector<1x128xf32>
    %5 = vector.broadcast %4 : vector<1x128xf32> to vector<128x128xf32>
    %6 = arith.addf %3, %5 : vector<128x128xf32>
    %cst_5 = arith.constant 0.000000e+00 : f32
    %7 = vector.broadcast %cst_5 : f32 to vector<128x128xf32>
    %8 = arith.maximumf %6, %7 : vector<128x128xf32>
    %9 = arith.truncf %8 : vector<128x128xf32> to vector<128x128xbf16>
    %c0_6 = arith.constant 0 : index
    %c0_7 = arith.constant 0 : index
    %10 = vector.load %arg4[%c0_6, %c0_7] : memref<128x128xbf16, #tpu.memory_space<vmem>>, vector<128x128xbf16>
    %cst_8 = arith.constant dense<0.000000e+00> : vector<128x128xf32>
    %11 = tpu.matmul %9, %10, %cst_8 {dimension_numbers = #tpu.dot_dimension_numbers<[1], [0], [0], [1], [0, 0, 1, 1], [], []>} : vector<128x128xbf16>, vector<128x128xbf16>, vector<128x128xf32> -> vector<128x128xf32>
    %c0_9 = arith.constant 0 : index
    %c0_10 = arith.constant 0 : index
    %12 = vector.load %arg5[%c0_9, %c0_10] : memref<1x128xf32, #tpu.memory_space<vmem>>, vector<1x128xf32>
    %13 = vector.broadcast %12 : vector<1x128xf32> to vector<128x128xf32>
    %14 = arith.addf %11, %13 : vector<128x128xf32>
    %cst_11 = arith.constant dense<0xFF800000> : vector<128xf32>
    %15 = vector.multi_reduction <maximumf>, %14, %cst_11 [1] : vector<128x128xf32> to vector<128xf32>
    %16 = vector.shape_cast %15 : vector<128xf32> to vector<128x1xf32>
    %17 = vector.broadcast %16 : vector<128x1xf32> to vector<128x128xf32>
    %18 = arith.subf %14, %17 : vector<128x128xf32>
    %19 = math.exp %18 : vector<128x128xf32>
    %cst_12 = arith.constant dense<0.000000e+00> : vector<128xf32>
    %20 = vector.multi_reduction <add>, %19, %cst_12 [1] : vector<128x128xf32> to vector<128xf32>
    %21 = vector.shape_cast %20 : vector<128xf32> to vector<128x1xf32>
    %22 = vector.broadcast %21 : vector<128x1xf32> to vector<128x128xf32>
    %23 = arith.divf %19, %22 : vector<128x128xf32>
    %24 = arith.truncf %23 : vector<128x128xf32> to vector<128x128xbf16>
    %c0_13 = arith.constant 0 : index
    %c0_14 = arith.constant 0 : index
    %25 = vector.load %arg6[%c0_13, %c0_14] : memref<128x128xbf16, #tpu.memory_space<vmem>>, vector<128x128xbf16>
    tpu.vector_store %arg6[%c0_13, %c0_14], %24 {strides = array<i32>} : memref<128x128xbf16, #tpu.memory_space<vmem>>, vector<128x128xbf16>,
    return
  }
  func.func @transform_0(%arg0: i32) -> (i32, i32) {
    %c0_i32 = arith.constant 0 : i32
    %c0_i32_0 = arith.constant 0 : i32
    return %arg0, %c0_i32 : i32, i32
  }
  func.func @transform_1(%arg0: i32) -> (i32, i32) {
    %c0_i32 = arith.constant 0 : i32
    %c0_i32_0 = arith.constant 0 : i32
    %c0_i32_1 = arith.constant 0 : i32
    return %c0_i32, %c0_i32_0 : i32, i32
  }
  func.func @transform_2(%arg0: i32) -> (i32, i32) {
    %c0_i32 = arith.constant 0 : i32
    %c0_i32_0 = arith.constant 0 : i32
    %c0_i32_1 = arith.constant 0 : i32
    return %c0_i32, %c0_i32_0 : i32, i32
  }
  func.func @transform_3(%arg0: i32) -> (i32, i32) {
    %c0_i32 = arith.constant 0 : i32
    %c0_i32_0 = arith.constant 0 : i32
    %c0_i32_1 = arith.constant 0 : i32
    return %c0_i32, %c0_i32_0 : i32, i32
  }
  func.func @transform_4(%arg0: i32) -> (i32, i32) {
    %c0_i32 = arith.constant 0 : i32
    %c0_i32_0 = arith.constant 0 : i32
    %c0_i32_1 = arith.constant 0 : i32
    return %c0_i32, %c0_i32_0 : i32, i32
  }
  func.func @transform_5(%arg0: i32) -> (i32, i32) {
    %c0_i32 = arith.constant 0 : i32
    %c0_i32_0 = arith.constant 0 : i32
    return %arg0, %c0_i32 : i32, i32
  }
}

</mosaic_0001>

<llo_original>
// kernel: tpu_custom_call.1
$region0: #{tpu_custom_call.1}
  #allocation0 [shape = 'u32[]', space=smem, size = 0x4, offset = 0x4, fixed_abs, tag = 'smem constant byte address 0x4 - core index']
  #allocation1 [shape = 'u32[144,128]{1,0:T(1,128)}', space=vmem, size = 0x12000, scoped, tag = 'internal scratch']
  %s0 = inlined_call_operand.vmem [shape: f32[256,64], index: 0, kind: input, shape index: {}]
  %s1 = inlined_call_operand.vmem [shape: bf16[64,128], index: 1, kind: input, shape index: {}]
  %s2 = inlined_call_operand.vmem [shape: f32[1,128], index: 2, kind: input, shape index: {}]
  %s3 = inlined_call_operand.vmem [shape: bf16[128,128], index: 3, kind: input, shape index: {}]
  %s4 = inlined_call_operand.vmem [shape: f32[1,128], index: 4, kind: input, shape index: {}]
  %s5 = inlined_call_operand.hbm [shape: bf16[256,128], index: 5, kind: output, shape index: {}]
  %s6 = sld [smem:[#allocation0]]
  $region53: #{tpu_custom_call.1} parent=0
    _
  %s8 = ssub.s32 1, %s6
  %s9 = scalar_select 0, %s8, %s6
  $region1: #{tpu_custom_call.1} parent=0
    #allocation2 [shape = 'u8[65536]{0}', space=vmem, size = 0x10000, scoped, tag = 'output window, operand 0']
    #allocation3 [shape = 's32[2]{0}', space=sflag, size = 0x8, scoped, tag = 'scoped memory for tpu_custom_call.1']
    %10 = vsyncpa [#allocation3], 0
    %s11 = scalar_lea.sflag [#allocation3], 1
    %12 = vsyncpa %s11, 0
    loop: start=0, step=1, limit=4
    $region2: #{tpu_custom_call.1} parent=1 // loop_pre_header
      _
    $region3: #{tpu_custom_call.1} parent=1 // loop_header
      %s14 = sphi 0, %s18
      %p15 = scmp.ge.s32.totalorder %s14, 4
      %s24 = sphi 0, %s26
      %s27 = sphi 0, %s24
      %s28 = sphi 0, %s27
      %s44 = sphi 0, %s28
      %s48 = sphi 0, %s48
      %s50 = sphi 0, %s48
      %s51 = sphi 0, %s50
      %s65 = sphi 0, %s51
      %s69 = sphi 0, %s69
      %s71 = sphi 0, %s69
      %s72 = sphi 0, %s71
      %s86 = sphi 0, %s72
      %s90 = sphi 0, %s90
      %s92 = sphi 0, %s90
      %s93 = sphi 0, %s92
      %s107 = sphi 0, %s93
      %s111 = sphi 0, %s111
      %s113 = sphi 0, %s111
      %s114 = sphi 0, %s113
      %s128 = sphi 0, %s114
      %s134 = sphi 0, %s136
      %s137 = sphi 0, %s134
      %s138 = sphi 0, %s137
      %s154 = sphi 0, %s138
    $region4: #{tpu_custom_call.1} parent=1 // loop_header_branch
      %17 = sbr.rel (%p15) target = $region8
    $region5: #{tpu_custom_call.1} parent=1 // loop_body
      %s19 = ssub.s32 %s14, 1
      %s20 = ssub.s32 %s14, 2
      %s21 = sadd.s32 %s14, 1
      %s22 = ssub.s32 %s14, %s21
      %p23 = scmp.eq.s32.totalorder %s22, 0
      %s25 = sadd.s32 %s24, 1
      %s26 = scalar_select %p23, %s24, %s25
      %p29 = pneg %p23
      %p30 = scmp.eq.s32.totalorder %s14, 1
      %p31 = por %p29, %p30
      %p32 = scmp.ne.s32.totalorder %s24, %s27
      %p33 = scmp.eq.s32.totalorder %s14, 0
      %p34 = por %p32, %p33
      %p35 = scmp.ne.s32.totalorder %s24, %s27
      %p36 = scmp.eq.s32.totalorder %s19, 1
      %p37 = por %p35, %p36
      %p38 = scmp.ne.s32.totalorder %s27, %s28
      %p39 = scmp.eq.s32.totalorder %s19, 0
      %p40 = por %p38, %p39
      %p41 = scmp.ne.s32.totalorder %s27, %s28
      %p42 = scmp.eq.s32.totalorder %s20, 1
      %p43 = por %p41, %p42
      %p45 = scmp.ne.s32.totalorder %s28, %s44
      %p46 = scmp.eq.s32.totalorder %s20, 0
      %p47 = por %p45, %p46
      %s49 = sadd.s32 %s48, 1
      %p52 = scmp.eq.s32.totalorder %s14, 1
      %p53 = scmp.ne.s32.totalorder %s48, %s50
      %p54 = scmp.eq.s32.totalorder %s14, 0
      %p55 = por %p53, %p54
      %p56 = scmp.ne.s32.totalorder %s48, %s50
      %p57 = scmp.eq.s32.totalorder %s19, 1
      %p58 = por %p56, %p57
      %p59 = scmp.ne.s32.totalorder %s50, %s51
      %p60 = scmp.eq.s32.totalorder %s19, 0
      %p61 = por %p59, %p60
      %p62 = scmp.ne.s32.totalorder %s50, %s51
      %p63 = scmp.eq.s32.totalorder %s20, 1
      %p64 = por %p62, %p63
      %p66 = scmp.ne.s32.totalorder %s51, %s65
      %p67 = scmp.eq.s32.totalorder %s20, 0
      %p68 = por %p66, %p67
      %s70 = sadd.s32 %s69, 1
      %p73 = scmp.eq.s32.totalorder %s14, 1
      %p74 = scmp.ne.s32.totalorder %s69, %s71
      %p75 = scmp.eq.s32.totalorder %s14, 0
      %p76 = por %p74, %p75
      %p77 = scmp.ne.s32.totalorder %s69, %s71
      %p78 = scmp.eq.s32.totalorder %s19, 1
      %p79 = por %p77, %p78
      %p80 = scmp.ne.s32.totalorder %s71, %s72
      %p81 = scmp.eq.s32.totalorder %s19, 0
      %p82 = por %p80, %p81
      %p83 = scmp.ne.s32.totalorder %s71, %s72
      %p84 = scmp.eq.s32.totalorder %s20, 1
      %p85 = por %p83, %p84
      %p87 = scmp.ne.s32.totalorder %s72, %s86
      %p88 = scmp.eq.s32.totalorder %s20, 0
      %p89 = por %p87, %p88
      %s91 = sadd.s32 %s90, 1
      %p94 = scmp.eq.s32.totalorder %s14, 1
      %p95 = scmp.ne.s32.totalorder %s90, %s92
      %p96 = scmp.eq.s32.totalorder %s14, 0
      %p97 = por %p95, %p96
      %p98 = scmp.ne.s32.totalorder %s90, %s92
      %p99 = scmp.eq.s32.totalorder %s19, 1
      %p100 = por %p98, %p99
      %p101 = scmp.ne.s32.totalorder %s92, %s93
      %p102 = scmp.eq.s32.totalorder %s19, 0
      %p103 = por %p101, %p102
      %p104 = scmp.ne.s32.totalorder %s92, %s93
      %p105 = scmp.eq.s32.totalorder %s20, 1
      %p106 = por %p104, %p105
      %p108 = scmp.ne.s32.totalorder %s93, %s107
      %p109 = scmp.eq.s32.totalorder %s20, 0
      %p110 = por %p108, %p109
      %s112 = sadd.s32 %s111, 1
      %p115 = scmp.eq.s32.totalorder %s14, 1
      %p116 = scmp.ne.s32.totalorder %s111, %s113
      %p117 = scmp.eq.s32.totalorder %s14, 0
      %p118 = por %p116, %p117
      %p119 = scmp.ne.s32.totalorder %s111, %s113
      %p120 = scmp.eq.s32.totalorder %s19, 1
      %p121 = por %p119, %p120
      %p122 = scmp.ne.s32.totalorder %s113, %s114
      %p123 = scmp.eq.s32.totalorder %s19, 0
      %p124 = por %p122, %p123
      %p125 = scmp.ne.s32.totalorder %s113, %s114
      %p126 = scmp.eq.s32.totalorder %s20, 1
      %p127 = por %p125, %p126
      %p129 = scmp.ne.s32.totalorder %s114, %s128
      %p130 = scmp.eq.s32.totalorder %s20, 0
      %p131 = por %p129, %p130
      %s132 = ssub.s32 %s14, %s21
      %p133 = scmp.eq.s32.totalorder %s132, 0
      %s135 = sadd.s32 %s134, 1
      %s136 = scalar_select %p133, %s134, %s135
      %p139 = pneg %p133
      %p140 = scmp.eq.s32.totalorder %s14, 1
      %p141 = por %p139, %p140
      %p142 = scmp.ne.s32.totalorder %s134, %s137
      %p143 = scmp.eq.s32.totalorder %s14, 0
      %p144 = por %p142, %p143
      %p145 = scmp.ne.s32.totalorder %s134, %s137
      %p146 = scmp.eq.s32.totalorder %s19, 1
      %p147 = por %p145, %p146
      %p148 = scmp.ne.s32.totalorder %s137, %s138
      %p149 = scmp.eq.s32.totalorder %s19, 0
      %p150 = por %p148, %p149
      %p151 = scmp.ne.s32.totalorder %s137, %s138
      %p152 = scmp.eq.s32.totalorder %s20, 1
      %p153 = por %p151, %p152
      %p155 = scmp.ne.s32.totalorder %s138, %s154
      %p156 = scmp.eq.s32.totalorder %s20, 0
      %p157 = por %p155, %p156
      %p158 = scmp.le.s32.totalorder 1, %s14
      %p159 = scmp.lt.s32.totalorder %s14, 3
      %p160 = pnand %p158, %p159
      %p161 = pneg %p160
      // Predicated region
      $region9: #{tpu_custom_call.1} parent=5 // pred_check
        _
      $region10: #{tpu_custom_call.1} parent=5 // pred_check_branch
        %163 = sbr.rel (%p160) target = $region12
      $region11: #{tpu_custom_call.1} parent=5 // pred_region
        %s164 = ssub.s32 %s14, 1
        // Predicated region
        $region13: #{tpu_custom_call.1} parent=11 // pred_check
          %p165 = pneg %p61
        $region14: #{tpu_custom_call.1} parent=11 // pred_check_branch
          %167 = sbr.rel (%p165) target = $region16
        $region15: #{tpu_custom_call.1} parent=11 // pred_region
          _
        $region16: #{tpu_custom_call.1} parent=11 // pred_fallthru
          _
        // Predicated region
        $region17: #{tpu_custom_call.1} parent=11 // pred_check
          %p168 = pneg %p82
        $region18: #{tpu_custom_call.1} parent=11 // pred_check_branch
          %170 = sbr.rel (%p168) target = $region20
        $region19: #{tpu_custom_call.1} parent=11 // pred_region
          _
        $region20: #{tpu_custom_call.1} parent=11 // pred_fallthru
          _
        // Predicated region
        $region21: #{tpu_custom_call.1} parent=11 // pred_check
          %p171 = pneg %p103
        $region22: #{tpu_custom_call.1} parent=11 // pred_check_branch
          %173 = sbr.rel (%p171) target = $region24
        $region23: #{tpu_custom_call.1} parent=11 // pred_region
          _
        $region24: #{tpu_custom_call.1} parent=11 // pred_fallthru
          _
        // Predicated region
        $region25: #{tpu_custom_call.1} parent=11 // pred_check
          %p174 = pneg %p124
        $region26: #{tpu_custom_call.1} parent=11 // pred_check_branch
          %176 = sbr.rel (%p174) target = $region28
        $region27: #{tpu_custom_call.1} parent=11 // pred_region
          _
        $region28: #{tpu_custom_call.1} parent=11 // pred_fallthru
          _
      $region12: #{tpu_custom_call.1} parent=5 // pred_fallthru
        _
      %p177 = scmp.lt.s32.totalorder %s14, 2
      // Predicated region
      $region29: #{tpu_custom_call.1} parent=5 // pred_check
        %p178 = pneg %p177
      $region30: #{tpu_custom_call.1} parent=5 // pred_check_branch
        %180 = sbr.rel (%p178) target = $region32
      $region31: #{tpu_custom_call.1} parent=5 // pred_region
        // Predicated region
        $region33: #{tpu_custom_call.1} parent=31 // pred_check
          %p181 = pneg %p34
        $region34: #{tpu_custom_call.1} parent=31 // pred_check_branch
          %183 = sbr.rel (%p181) target = $region36
        $region35: #{tpu_custom_call.1} parent=31 // pred_region
          %s184 = smul.u32 16, %s14
          %p185 = scmp.lt.s32.totalorder %s184, 31
          %s186 = scalar_select %p185, %s184, 31
          %s187 = smul.addr %s186, 8
          %s188 = scalar_lea.vmem %s0, %s187
          %s189 = smul.u32 16, %s14
        $region36: #{tpu_custom_call.1} parent=31 // pred_fallthru
          _
      $region32: #{tpu_custom_call.1} parent=5 // pred_fallthru
        _
      %p190 = scmp.le.s32.totalorder 1, %s14
      %p191 = scmp.lt.s32.totalorder %s14, 3
      %p192 = pnand %p190, %p191
      %p193 = pneg %p192
      // Predicated region
      $region37: #{tpu_custom_call.1} parent=5 // pred_check
        _
      $region38: #{tpu_custom_call.1} parent=5 // pred_check_branch
        %195 = sbr.rel (%p192) target = $region40
      $region39: #{tpu_custom_call.1} parent=5 // pred_region
        %s196 = ssub.s32 %s14, 1
        %s197 = smul.u32 16, %s19
        %p198 = scmp.lt.s32.totalorder %s197, 31
        %s199 = scalar_select %p198, %s197, 31
        %s200 = smul.addr %s199, 8
        %s201 = scalar_lea.vmem %s0, %s200
        %p202 = pneg %p40
        %p203 = pneg %p37
        %p204 = pneg %p61
        %p205 = pneg %p58
        %p206 = pneg %p82
        %p207 = pneg %p79
        %p208 = pneg %p103
        %p209 = pneg %p100
        %p210 = pneg %p124
        %p211 = pneg %p121
        %p212 = pneg %p150
        %p213 = pneg %p147
        %s214 = sand.u32 %s137, 1
        %s215 = scalar_lea.sflag [#allocation3], %s214
        %s216 = sand.u32 %s137, 1
        %s217 = smul.addr %s216, 64
        %s218 = scalar_lea.vmem [#allocation2], %s217
        %s219 = smul.u32 16, %s19
        %p220 = scmp.lt.s32.totalorder %s219, 31
        %s221 = scalar_select %p220, %s219, 31
        %s222 = smul.addr %s221, 8
        %s223 = scalar_lea.vmem %s0, %s222
        %s224 = smul.u32 16, %s19
        %s225 = smul.u32 16, %s19
        %v227 = vld [vmem:[%s223] sm:$0xff]
        %v228 = vld [vmem:[%s223 + $0x8] sm:$0xff]
        %v229 = vld [vmem:[%s223 + $0x10] sm:$0xff]
        %v230 = vld [vmem:[%s223 + $0x18] sm:$0xff]
        %v231 = vld [vmem:[%s223 + $0x20] sm:$0xff]
        %v232 = vld [vmem:[%s223 + $0x28] sm:$0xff]
        %v233 = vld [vmem:[%s223 + $0x30] sm:$0xff]
        %v234 = vld [vmem:[%s223 + $0x38] sm:$0xff]
        %v235 = vld [vmem:[%s223 + $0x40] sm:$0xff]
        %v236 = vld [vmem:[%s223 + $0x48] sm:$0xff]
        %v237 = vld [vmem:[%s223 + $0x50] sm:$0xff]
        %v238 = vld [vmem:[%s223 + $0x58] sm:$0xff]
        %v239 = vld [vmem:[%s223 + $0x60] sm:$0xff]
        %v240 = vld [vmem:[%s223 + $0x68] sm:$0xff]
        %v241 = vld [vmem:[%s223 + $0x70] sm:$0xff]
        %v242 = vld [vmem:[%s223 + $0x78] sm:$0xff]
        %v243 = vpack.c.bf16 %v228, %v227
        %v244 = vpack.c.bf16 %v230, %v229
        %v245 = vpack.c.bf16 %v232, %v231
        %v246 = vpack.c.bf16 %v234, %v233
        %v247 = vpack.c.bf16 %v236, %v235
        %v248 = vpack.c.bf16 %v238, %v237
        %v249 = vpack.c.bf16 %v240, %v239
        %v250 = vpack.c.bf16 %v242, %v241
        %v251 = vld [vmem:[%s1] sm:$0xf]
        %v252 = vld [vmem:[%s1 + $0x4] sm:$0xf]
        %v253 = vld [vmem:[%s1 + $0x8] sm:$0xf]
        %v254 = vld [vmem:[%s1 + $0xc] sm:$0xf]
        %v255 = vld [vmem:[%s1 + $0x10] sm:$0xf]
        %v256 = vld [vmem:[%s1 + $0x14] sm:$0xf]
        %v257 = vld [vmem:[%s1 + $0x18] sm:$0xf]
        %v258 = vld [vmem:[%s1 + $0x1c] sm:$0xf]
        %v259 = vld [vmem:[%s2] sm:$0x1]
        %v261 = vlaneseq
        %v262 = vshrl.u32 %v261, 7
        %v263 = vsub.s32 0, %v262
        %v264 = vrot.slane %v259, %v263
        %v274 = vunpack.c.l.b16 %v251
        %v275 = vunpack.c.l.b16 %v252
        %v276 = vunpack.c.l.b16 %v253
        %v277 = vunpack.c.l.b16 %v254
        %v278 = vunpack.c.l.b16 %v255
        %v279 = vunpack.c.l.b16 %v256
        %v280 = vunpack.c.l.b16 %v257
        %v281 = vunpack.c.l.b16 %v258
        %v282 = vpack.c.b16 %v275, %v274
        %v283 = vpack.c.b16 %v277, %v276
        %v284 = vpack.c.b16 %v279, %v278
        %v285 = vpack.c.b16 %v281, %v280
        %vm290 = vcmask 523264
        %v292 = vsel %vm290, %v243, 0
        %v295 = vsel %vm290, %v244, 0
        %v298 = vsel %vm290, %v245, 0
        %v301 = vsel %vm290, %v246, 0
        %v304 = vsel %vm290, %v247, 0
        %v307 = vsel %vm290, %v248, 0
        %v310 = vsel %vm290, %v249, 0
        %v313 = vsel %vm290, %v250, 0
        %315 = vmatprep.subr.bf16.mxu0 0
        %316 = vmatpush1.bf16.msra.mxu0 0
        %317 = vmatprep.subr.bf16.mxu0 0
        %318 = vmatpush1.bf16.msra.mxu0 0
        %319 = vmatprep.subr.bf16.mxu0 0
        %320 = vmatpush1.bf16.msra.mxu0 0
        %321 = vmatprep.subr.bf16.mxu0 0
        %322 = vmatpush1.bf16.msra.mxu0 0
        %323 = vmatprep.subr.bf16.mxu0 0
        %324 = vmatpush1.bf16.msra.mxu0 %v285
        %325 = vmatprep.subr.bf16.mxu0 0
        %326 = vmatpush1.bf16.msra.mxu0 %v284
        %327 = vmatprep.subr.bf16.mxu0 0
        %328 = vmatpush1.bf16.msra.mxu0 %v283
        %329 = vmatprep.subr.bf16.mxu0 0
        %330 = vmatpush1.bf16.msra.mxu0 %v282
        %331 = vmatprep.subr.bf16.mxu0 0
        %332 = vmatpush2.bf16.msra.mxu0 0
        %333 = vmatprep.subr.bf16.mxu0 0
        %334 = vmatpush2.bf16.msra.mxu0 0
        %335 = vmatprep.subr.bf16.mxu0 0
        %336 = vmatpush2.bf16.msra.mxu0 0
        %337 = vmatprep.subr.bf16.mxu0 0
        %338 = vmatpush2.bf16.msra.mxu0 0
        %339 = vmatprep.subr.bf16.mxu0 0
        %340 = vmatpush2.bf16.msra.mxu0 0
        %341 = vmatprep.subr.bf16.mxu0 0
        %342 = vmatpush2.bf16.msra.mxu0 0
        %343 = vmatprep.subr.bf16.mxu0 0
        %344 = vmatpush2.bf16.msra.mxu0 0
        %345 = vmatprep.subr.bf16.mxu0 0
        %346 = vmatpush2.bf16.msra.mxu0 0
        %347 = vmatprep.mubr.bf16.mxu0 0
        %348 = vmatmul.mubr.bf16.gmra.mxu0 %v292
        %v349 = vpop.f32.mrf.mxu0
        %v350 = vadd.f32 %v264, %v349
        %v351 = vpop.f32.mrf.mxu0
        %v352 = vpop.f32.mrf.mxu0
        %v353 = vadd.f32 %v264, %v352
        %v354 = vpop.f32.mrf.mxu0
        %355 = vmatprep.mubr.bf16.mxu0 0
        %356 = vmatmul.mubr.bf16.gmra.mxu0 %v295
        %v357 = vpop.f32.mrf.mxu0
        %v358 = vadd.f32 %v264, %v357
        %v359 = vpop.f32.mrf.mxu0
        %v360 = vpop.f32.mrf.mxu0
        %v361 = vadd.f32 %v264, %v360
        %v362 = vpop.f32.mrf.mxu0
        %363 = vmatprep.mubr.bf16.mxu0 0
        %364 = vmatmul.mubr.bf16.gmra.mxu0 %v298
        %v365 = vpop.f32.mrf.mxu0
        %v366 = vadd.f32 %v264, %v365
        %v367 = vpop.f32.mrf.mxu0
        %v368 = vpop.f32.mrf.mxu0
        %v369 = vadd.f32 %v264, %v368
        %v370 = vpop.f32.mrf.mxu0
        %371 = vmatprep.mubr.bf16.mxu0 0
        %372 = vmatmul.mubr.bf16.gmra.mxu0 %v301
        %v373 = vpop.f32.mrf.mxu0
        %v374 = vadd.f32 %v264, %v373
        %v375 = vpop.f32.mrf.mxu0
        %v376 = vpop.f32.mrf.mxu0
        %v377 = vadd.f32 %v264, %v376
        %v378 = vpop.f32.mrf.mxu0
        %379 = vmatprep.mubr.bf16.mxu0 0
        %380 = vmatmul.mubr.bf16.gmra.mxu0 %v304
        %v381 = vpop.f32.mrf.mxu0
        %v382 = vadd.f32 %v264, %v381
        %v383 = vpop.f32.mrf.mxu0
        %v384 = vpop.f32.mrf.mxu0
        %v385 = vadd.f32 %v264, %v384
        %v386 = vpop.f32.mrf.mxu0
        %387 = vmatprep.mubr.bf16.mxu0 0
        %388 = vmatmul.mubr.bf16.gmra.mxu0 %v307
        %v389 = vpop.f32.mrf.mxu0
        %v390 = vadd.f32 %v264, %v389
        %v391 = vpop.f32.mrf.mxu0
        %v392 = vpop.f32.mrf.mxu0
        %v393 = vadd.f32 %v264, %v392
        %v394 = vpop.f32.mrf.mxu0
        %395 = vmatprep.mubr.bf16.mxu0 0
        %396 = vmatmul.mubr.bf16.gmra.mxu0 %v310
        %v397 = vpop.f32.mrf.mxu0
        %v398 = vadd.f32 %v264, %v397
        %v399 = vpop.f32.mrf.mxu0
        %v400 = vpop.f32.mrf.mxu0
        %v401 = vadd.f32 %v264, %v400
        %v402 = vpop.f32.mrf.mxu0
        %403 = vmatprep.mubr.bf16.mxu0 0
        %404 = vmatmul.mubr.bf16.gmra.mxu0 %v313
        %v405 = vpop.f32.mrf.mxu0
        %v406 = vadd.f32 %v264, %v405
        %v407 = vpop.f32.mrf.mxu0
        %v408 = vpop.f32.mrf.mxu0
        %v409 = vadd.f32 %v264, %v408
        %v410 = vpop.f32.mrf.mxu0
        %411 = vdwg.mxu0
        %v412 = vmax.f32 %v350, 0.0
        %v413 = vmax.f32 %v353, 0.0
        %v414 = vmax.f32 %v358, 0.0
        %v415 = vmax.f32 %v361, 0.0
        %v416 = vmax.f32 %v366, 0.0
        %v417 = vmax.f32 %v369, 0.0
        %v418 = vmax.f32 %v374, 0.0
        %v419 = vmax.f32 %v377, 0.0
        %v420 = vmax.f32 %v382, 0.0
        %v421 = vmax.f32 %v385, 0.0
        %v422 = vmax.f32 %v390, 0.0
        %v423 = vmax.f32 %v393, 0.0
        %v424 = vmax.f32 %v398, 0.0
        %v425 = vmax.f32 %v401, 0.0
        %v426 = vmax.f32 %v406, 0.0
        %v427 = vmax.f32 %v409, 0.0
        %v428 = vpack.c.bf16 %v413, %v412
        %v429 = vpack.c.bf16 %v415, %v414
        %v430 = vpack.c.bf16 %v417, %v416
        %v431 = vpack.c.bf16 %v419, %v418
        %v432 = vpack.c.bf16 %v421, %v420
        %v433 = vpack.c.bf16 %v423, %v422
        %v434 = vpack.c.bf16 %v425, %v424
        %v435 = vpack.c.bf16 %v427, %v426
        %v436 = vld [vmem:[%s3] sm:$0xf]
        %v437 = vld [vmem:[%s3 + $0x4] sm:$0xf]
        %v438 = vld [vmem:[%s3 + $0x8] sm:$0xf]
        %v439 = vld [vmem:[%s3 + $0xc] sm:$0xf]
        %v440 = vld [vmem:[%s3 + $0x10] sm:$0xf]
        %v441 = vld [vmem:[%s3 + $0x14] sm:$0xf]
        %v442 = vld [vmem:[%s3 + $0x18] sm:$0xf]
        %v443 = vld [vmem:[%s3 + $0x1c] sm:$0xf]
        %v444 = vld [vmem:[%s3 + $0x20] sm:$0xf]
        %v445 = vld [vmem:[%s3 + $0x24] sm:$0xf]
        %v446 = vld [vmem:[%s3 + $0x28] sm:$0xf]
        %v447 = vld [vmem:[%s3 + $0x2c] sm:$0xf]
        %v448 = vld [vmem:[%s3 + $0x30] sm:$0xf]
        %v449 = vld [vmem:[%s3 + $0x34] sm:$0xf]
        %v450 = vld [vmem:[%s3 + $0x38] sm:$0xf]
        %v451 = vld [vmem:[%s3 + $0x3c] sm:$0xf]
        %v452 = vld [vmem:[%s4] sm:$0x1]
        %v454 = vlaneseq
        %v455 = vshrl.u32 %v454, 7
        %v456 = vsub.s32 0, %v455
        %v457 = vrot.slane %v452, %v456
        %v475 = vunpack.c.l.b16 %v436
        %v476 = vunpack.c.l.b16 %v437
        %v477 = vunpack.c.l.b16 %v438
        %v478 = vunpack.c.l.b16 %v439
        %v479 = vunpack.c.l.b16 %v440
        %v480 = vunpack.c.l.b16 %v441
        %v481 = vunpack.c.l.b16 %v442
        %v482 = vunpack.c.l.b16 %v443
        %v483 = vunpack.c.l.b16 %v444
        %v484 = vunpack.c.l.b16 %v445
        %v485 = vunpack.c.l.b16 %v446
        %v486 = vunpack.c.l.b16 %v447
        %v487 = vunpack.c.l.b16 %v448
        %v488 = vunpack.c.l.b16 %v449
        %v489 = vunpack.c.l.b16 %v450
        %v490 = vunpack.c.l.b16 %v451
        %v491 = vpack.c.b16 %v476, %v475
        %v492 = vpack.c.b16 %v478, %v477
        %v493 = vpack.c.b16 %v480, %v479
        %v494 = vpack.c.b16 %v482, %v481
        %v495 = vpack.c.b16 %v484, %v483
        %v496 = vpack.c.b16 %v486, %v485
        %v497 = vpack.c.b16 %v488, %v487
        %v498 = vpack.c.b16 %v490, %v489
        %507 = vmatprep.subr.bf16.mxu0 0
        %508 = vmatpush1.bf16.msra.mxu0 %v498
        %509 = vmatprep.subr.bf16.mxu0 0
        %510 = vmatpush1.bf16.msra.mxu0 %v497
        %511 = vmatprep.subr.bf16.mxu0 0
        %512 = vmatpush1.bf16.msra.mxu0 %v496
        %513 = vmatprep.subr.bf16.mxu0 0
        %514 = vmatpush1.bf16.msra.mxu0 %v495
        %515 = vmatprep.subr.bf16.mxu0 0
        %516 = vmatpush1.bf16.msra.mxu0 %v494
        %517 = vmatprep.subr.bf16.mxu0 0
        %518 = vmatpush1.bf16.msra.mxu0 %v493
        %519 = vmatprep.subr.bf16.mxu0 0
        %520 = vmatpush1.bf16.msra.mxu0 %v492
        %521 = vmatprep.subr.bf16.mxu0 0
        %522 = vmatpush1.bf16.msra.mxu0 %v491
        %523 = vmatprep.subr.bf16.mxu0 0
        %524 = vmatpush2.bf16.msra.mxu0 0
        %525 = vmatprep.subr.bf16.mxu0 0
        %526 = vmatpush2.bf16.msra.mxu0 0
        %527 = vmatprep.subr.bf16.mxu0 0
        %528 = vmatpush2.bf16.msra.mxu0 0
        %529 = vmatprep.subr.bf16.mxu0 0
        %530 = vmatpush2.bf16.msra.mxu0 0
        %531 = vmatprep.subr.bf16.mxu0 0
        %532 = vmatpush2.bf16.msra.mxu0 0
        %533 = vmatprep.subr.bf16.mxu0 0
        %534 = vmatpush2.bf16.msra.mxu0 0
        %535 = vmatprep.subr.bf16.mxu0 0
        %536 = vmatpush2.bf16.msra.mxu0 0
        %537 = vmatprep.subr.bf16.mxu0 0
        %538 = vmatpush2.bf16.msra.mxu0 0
        %539 = vmatprep.mubr.bf16.mxu0 0
        %540 = vmatmul.mubr.bf16.gmra.mxu0 %v428
        %v541 = vpop.f32.mrf.mxu0
        %v542 = vadd.f32 %v457, %v541
        %v543 = vpop.f32.mrf.mxu0
        %v544 = vpop.f32.mrf.mxu0
        %v545 = vadd.f32 %v457, %v544
        %v546 = vpop.f32.mrf.mxu0
        %547 = vmatprep.mubr.bf16.mxu0 0
        %548 = vmatmul.mubr.bf16.gmra.mxu0 %v429
        %v549 = vpop.f32.mrf.mxu0
        %v550 = vadd.f32 %v457, %v549
        %v551 = vpop.f32.mrf.mxu0
        %v552 = vpop.f32.mrf.mxu0
        %v553 = vadd.f32 %v457, %v552
        %v554 = vpop.f32.mrf.mxu0
        %555 = vmatprep.mubr.bf16.mxu0 0
        %556 = vmatmul.mubr.bf16.gmra.mxu0 %v430
        %v557 = vpop.f32.mrf.mxu0
        %v558 = vadd.f32 %v457, %v557
        %v559 = vpop.f32.mrf.mxu0
        %v560 = vpop.f32.mrf.mxu0
        %v561 = vadd.f32 %v457, %v560
        %v562 = vpop.f32.mrf.mxu0
        %563 = vmatprep.mubr.bf16.mxu0 0
        %564 = vmatmul.mubr.bf16.gmra.mxu0 %v431
        %v565 = vpop.f32.mrf.mxu0
        %v566 = vadd.f32 %v457, %v565
        %v567 = vpop.f32.mrf.mxu0
        %v568 = vpop.f32.mrf.mxu0
        %v569 = vadd.f32 %v457, %v568
        %v570 = vpop.f32.mrf.mxu0
        %571 = vmatprep.mubr.bf16.mxu0 0
        %572 = vmatmul.mubr.bf16.gmra.mxu0 %v432
        %v573 = vpop.f32.mrf.mxu0
        %v574 = vadd.f32 %v457, %v573
        %v575 = vpop.f32.mrf.mxu0
        %v576 = vpop.f32.mrf.mxu0
        %v577 = vadd.f32 %v457, %v576
        %v578 = vpop.f32.mrf.mxu0
        %579 = vmatprep.mubr.bf16.mxu0 0
        %580 = vmatmul.mubr.bf16.gmra.mxu0 %v433
        %v581 = vpop.f32.mrf.mxu0
        %v582 = vadd.f32 %v457, %v581
        %v583 = vpop.f32.mrf.mxu0
        %v584 = vpop.f32.mrf.mxu0
        %v585 = vadd.f32 %v457, %v584
        %v586 = vpop.f32.mrf.mxu0
        %587 = vmatprep.mubr.bf16.mxu0 0
        %588 = vmatmul.mubr.bf16.gmra.mxu0 %v434
        %v589 = vpop.f32.mrf.mxu0
        %v590 = vadd.f32 %v457, %v589
        %v591 = vpop.f32.mrf.mxu0
        %v592 = vpop.f32.mrf.mxu0
        %v593 = vadd.f32 %v457, %v592
        %v594 = vpop.f32.mrf.mxu0
        %595 = vmatprep.mubr.bf16.mxu0 0
        %596 = vmatmul.mubr.bf16.gmra.mxu0 %v435
        %v597 = vpop.f32.mrf.mxu0
        %v598 = vadd.f32 %v457, %v597
        %v599 = vpop.f32.mrf.mxu0
        %v600 = vpop.f32.mrf.mxu0
        %v601 = vadd.f32 %v457, %v600
        %v602 = vpop.f32.mrf.mxu0
        %603 = vdwg.mxu0
        %604 = vmax.xlane.f32.xlu0 %v542
        %v605 = vpop.xlane.xlu0 %604
        %606 = vmax.xlane.f32.xlu0 %v545
        %v607 = vpop.xlane.xlu0 %606
        %608 = vmax.xlane.f32.xlu0 %v550
        %v609 = vpop.xlane.xlu0 %608
        %610 = vmax.xlane.f32.xlu0 %v553
        %v611 = vpop.xlane.xlu0 %610
        %612 = vmax.xlane.f32.xlu0 %v558
        %v613 = vpop.xlane.xlu0 %612
        %614 = vmax.xlane.f32.xlu0 %v561
        %v615 = vpop.xlane.xlu0 %614
        %616 = vmax.xlane.f32.xlu0 %v566
        %v617 = vpop.xlane.xlu0 %616
        %618 = vmax.xlane.f32.xlu0 %v569
        %v619 = vpop.xlane.xlu0 %618
        %620 = vmax.xlane.f32.xlu0 %v574
        %v621 = vpop.xlane.xlu0 %620
        %622 = vmax.xlane.f32.xlu0 %v577
        %v623 = vpop.xlane.xlu0 %622
        %624 = vmax.xlane.f32.xlu0 %v582
        %v625 = vpop.xlane.xlu0 %624
        %626 = vmax.xlane.f32.xlu0 %v585
        %v627 = vpop.xlane.xlu0 %626
        %628 = vmax.xlane.f32.xlu0 %v590
        %v629 = vpop.xlane.xlu0 %628
        %630 = vmax.xlane.f32.xlu0 %v593
        %v631 = vpop.xlane.xlu0 %630
        %632 = vmax.xlane.f32.xlu0 %v598
        %v633 = vpop.xlane.xlu0 %632
        %634 = vmax.xlane.f32.xlu0 %v601
        %v635 = vpop.xlane.xlu0 %634
        %v636 = vsub.f32 %v542, %v605
        %v637 = vsub.f32 %v545, %v607
        %v638 = vsub.f32 %v550, %v609
        %v639 = vsub.f32 %v553, %v611
        %v640 = vsub.f32 %v558, %v613
        %v641 = vsub.f32 %v561, %v615
        %v642 = vsub.f32 %v566, %v617
        %v643 = vsub.f32 %v569, %v619
        %v644 = vsub.f32 %v574, %v621
        %v645 = vsub.f32 %v577, %v623
        %v646 = vsub.f32 %v582, %v625
        %v647 = vsub.f32 %v585, %v627
        %v648 = vsub.f32 %v590, %v629
        %v649 = vsub.f32 %v593, %v631
        %v650 = vsub.f32 %v598, %v633
        %v651 = vsub.f32 %v601, %v635
        %v652 = vmul.f32 %v636, 1.442695
        %v653 = vpow.pop %v652
        %v654 = vmul.f32 %v637, 1.442695
        %v655 = vpow.pop %v654
        %v656 = vmul.f32 %v638, 1.442695
        %v657 = vpow.pop %v656
        %v658 = vmul.f32 %v639, 1.442695
        %v659 = vpow.pop %v658
        %v660 = vmul.f32 %v640, 1.442695
        %v661 = vpow.pop %v660
        %v662 = vmul.f32 %v641, 1.442695
        %v663 = vpow.pop %v662
        %v664 = vmul.f32 %v642, 1.442695
        %v665 = vpow.pop %v664
        %v666 = vmul.f32 %v643, 1.442695
        %v667 = vpow.pop %v666
        %v668 = vmul.f32 %v644, 1.442695
        %v669 = vpow.pop %v668
        %v670 = vmul.f32 %v645, 1.442695
        %v671 = vpow.pop %v670
        %v672 = vmul.f32 %v646, 1.442695
        %v673 = vpow.pop %v672
        %v674 = vmul.f32 %v647, 1.442695
        %v675 = vpow.pop %v674
        %v676 = vmul.f32 %v648, 1.442695
        %v677 = vpow.pop %v676
        %v678 = vmul.f32 %v649, 1.442695
        %v679 = vpow.pop %v678
        %v680 = vmul.f32 %v650, 1.442695
        %v681 = vpow.pop %v680
        %v682 = vmul.f32 %v651, 1.442695
        %v683 = vpow.pop %v682
        %684 = vadd.xlane.f32.xlu0 %v653
        %v685 = vpop.xlane.xlu0 %684
        %686 = vadd.xlane.f32.xlu0 %v655
        %v687 = vpop.xlane.xlu0 %686
        %688 = vadd.xlane.f32.xlu0 %v657
        %v689 = vpop.xlane.xlu0 %688
        %690 = vadd.xlane.f32.xlu0 %v659
        %v691 = vpop.xlane.xlu0 %690
        %692 = vadd.xlane.f32.xlu0 %v661
        %v693 = vpop.xlane.xlu0 %692
        %694 = vadd.xlane.f32.xlu0 %v663
        %v695 = vpop.xlane.xlu0 %694
        %696 = vadd.xlane.f32.xlu0 %v665
        %v697 = vpop.xlane.xlu0 %696
        %698 = vadd.xlane.f32.xlu0 %v667
        %v699 = vpop.xlane.xlu0 %698
        %700 = vadd.xlane.f32.xlu0 %v669
        %v701 = vpop.xlane.xlu0 %700
        %702 = vadd.xlane.f32.xlu0 %v671
        %v703 = vpop.xlane.xlu0 %702
        %704 = vadd.xlane.f32.xlu0 %v673
        %v705 = vpop.xlane.xlu0 %704
        %706 = vadd.xlane.f32.xlu0 %v675
        %v707 = vpop.xlane.xlu0 %706
        %708 = vadd.xlane.f32.xlu0 %v677
        %v709 = vpop.xlane.xlu0 %708
        %710 = vadd.xlane.f32.xlu0 %v679
        %v711 = vpop.xlane.xlu0 %710
        %712 = vadd.xlane.f32.xlu0 %v681
        %v713 = vpop.xlane.xlu0 %712
        %714 = vadd.xlane.f32.xlu0 %v683
        %v715 = vpop.xlane.xlu0 %714
        %v716 = vrcp.pop %v685
        %v717 = vmul.f32 %v653, %v716
        %v718 = vrcp.pop %v687
        %v719 = vmul.f32 %v655, %v718
        %v720 = vrcp.pop %v689
        %v721 = vmul.f32 %v657, %v720
        %v722 = vrcp.pop %v691
        %v723 = vmul.f32 %v659, %v722
        %v724 = vrcp.pop %v693
        %v725 = vmul.f32 %v661, %v724
        %v726 = vrcp.pop %v695
        %v727 = vmul.f32 %v663, %v726
        %v728 = vrcp.pop %v697
        %v729 = vmul.f32 %v665, %v728
        %v730 = vrcp.pop %v699
        %v731 = vmul.f32 %v667, %v730
        %v732 = vrcp.pop %v701
        %v733 = vmul.f32 %v669, %v732
        %v734 = vrcp.pop %v703
        %v735 = vmul.f32 %v671, %v734
        %v736 = vrcp.pop %v705
        %v737 = vmul.f32 %v673, %v736
        %v738 = vrcp.pop %v707
        %v739 = vmul.f32 %v675, %v738
        %v740 = vrcp.pop %v709
        %v741 = vmul.f32 %v677, %v740
        %v742 = vrcp.pop %v711
        %v743 = vmul.f32 %v679, %v742
        %v744 = vrcp.pop %v713
        %v745 = vmul.f32 %v681, %v744
        %v746 = vrcp.pop %v715
        %v747 = vmul.f32 %v683, %v746
        %v748 = vpack.c.bf16 %v719, %v717
        %v749 = vpack.c.bf16 %v723, %v721
        %v750 = vpack.c.bf16 %v727, %v725
        %v751 = vpack.c.bf16 %v731, %v729
        %v752 = vpack.c.bf16 %v735, %v733
        %v753 = vpack.c.bf16 %v739, %v737
        %v754 = vpack.c.bf16 %v743, %v741
        %v755 = vpack.c.bf16 %v747, %v745
        %v764 = vunpack.c.l.b16 %v748
        %v765 = vunpack.c.h.b16 %v748
        %v766 = vunpack.c.l.b16 %v749
        %v767 = vunpack.c.h.b16 %v749
        %v768 = vunpack.c.l.b16 %v750
        %v769 = vunpack.c.h.b16 %v750
        %v770 = vunpack.c.l.b16 %v751
        %v771 = vunpack.c.h.b16 %v751
        %v772 = vunpack.c.l.b16 %v752
        %v773 = vunpack.c.h.b16 %v752
        %v774 = vunpack.c.l.b16 %v753
        %v775 = vunpack.c.h.b16 %v753
        %v776 = vunpack.c.l.b16 %v754
        %v777 = vunpack.c.h.b16 %v754
        %v778 = vunpack.c.l.b16 %v755
        %v779 = vunpack.c.h.b16 %v755
        %v780 = vpack.c.b16 %v764, %v764
        %v781 = vpack.c.b16 %v765, %v765
        %v782 = vpack.c.b16 %v766, %v766
        %v783 = vpack.c.b16 %v767, %v767
        %v784 = vpack.c.b16 %v768, %v768
        %v785 = vpack.c.b16 %v769, %v769
        %v786 = vpack.c.b16 %v770, %v770
        %v787 = vpack.c.b16 %v771, %v771
        %v788 = vpack.c.b16 %v772, %v772
        %v789 = vpack.c.b16 %v773, %v773
        %v790 = vpack.c.b16 %v774, %v774
        %v791 = vpack.c.b16 %v775, %v775
        %v792 = vpack.c.b16 %v776, %v776
        %v793 = vpack.c.b16 %v777, %v777
        %v794 = vpack.c.b16 %v778, %v778
        %v795 = vpack.c.b16 %v779, %v779
        %812 = vst [vmem:[%s218] sm:$0xf] %v780
        %813 = vst [vmem:[%s218 + $0x4] sm:$0xf] %v781
        %814 = vst [vmem:[%s218 + $0x8] sm:$0xf] %v782
        %815 = vst [vmem:[%s218 + $0xc] sm:$0xf] %v783
        %816 = vst [vmem:[%s218 + $0x10] sm:$0xf] %v784
        %817 = vst [vmem:[%s218 + $0x14] sm:$0xf] %v785
        %818 = vst [vmem:[%s218 + $0x18] sm:$0xf] %v786
        %819 = vst [vmem:[%s218 + $0x1c] sm:$0xf] %v787
        %820 = vst [vmem:[%s218 + $0x20] sm:$0xf] %v788
        %821 = vst [vmem:[%s218 + $0x24] sm:$0xf] %v789
        %822 = vst [vmem:[%s218 + $0x28] sm:$0xf] %v790
        %823 = vst [vmem:[%s218 + $0x2c] sm:$0xf] %v791
        %824 = vst [vmem:[%s218 + $0x30] sm:$0xf] %v792
        %825 = vst [vmem:[%s218 + $0x34] sm:$0xf] %v793
        %826 = vst [vmem:[%s218 + $0x38] sm:$0xf] %v794
        %827 = vst [vmem:[%s218 + $0x3c] sm:$0xf] %v795
        %s828 = sand.u32 %s137, 1
        %s829 = scalar_lea.sflag [#allocation3], %s828
        %s830 = sand.u32 %s137, 1
        %s831 = smul.addr %s830, 64
        %s832 = scalar_lea.vmem [#allocation2], %s831
        // Predicated region
        $region41: #{tpu_custom_call.1} parent=39 // pred_check
          %p833 = pneg %p147
        $region42: #{tpu_custom_call.1} parent=39 // pred_check_branch
          %835 = sbr.rel (%p833) target = $region44
        $region43: #{tpu_custom_call.1} parent=39 // pred_region
          %s836 = smul.u32 16, %s19
          %s838 = ssub.s32 1024, 1024
          %839 = vsyncadd %s829, %s838
          %s840 = smul.addr %s836, 64
          %s841 = scalar_lea.hbm %s5, %s840
          %s842 = sshll.u32 %s832, 4
          %s843 = int_to_ptr.vmem [resolvable:$true] %s842
          %848 = dma.vmem_to_hbm [thread:$0]  %s843, 1024, %s841, %s829, 64, 64, 4
        $region44: #{tpu_custom_call.1} parent=39 // pred_fallthru
          _
      $region40: #{tpu_custom_call.1} parent=5 // pred_fallthru
        _
      %p849 = scmp.le.s32.totalorder 2, %s14
      // Predicated region
      $region45: #{tpu_custom_call.1} parent=5 // pred_check
        %p850 = pneg %p849
      $region46: #{tpu_custom_call.1} parent=5 // pred_check_branch
        %852 = sbr.rel (%p850) target = $region48
      $region47: #{tpu_custom_call.1} parent=5 // pred_region
        %s853 = ssub.s32 %s14, 2
        // Predicated region
        $region49: #{tpu_custom_call.1} parent=47 // pred_check
          %p854 = pneg %p153
        $region50: #{tpu_custom_call.1} parent=47 // pred_check_branch
          %856 = sbr.rel (%p854) target = $region52
        $region51: #{tpu_custom_call.1} parent=47 // pred_region
          %s857 = sand.u32 %s138, 1
          %s858 = scalar_lea.sflag [#allocation3], %s857
          %s859 = sand.u32 %s138, 1
          %s860 = smul.addr %s859, 64
          %s861 = scalar_lea.vmem [#allocation2], %s860
          %862 = dma.done %s858, 1024
        $region52: #{tpu_custom_call.1} parent=47 // pred_fallthru
          _
      $region48: #{tpu_custom_call.1} parent=5 // pred_fallthru
        _
    $region6: #{tpu_custom_call.1} parent=1 // loop_footer
      %s18 = sadd.s32 1, %s14
    $region7: #{tpu_custom_call.1} parent=1 // loop_footer_branch
      %13 = sbr.rel target = $region3
    $region8: #{tpu_custom_call.1} parent=1 // loop_exit
      _
    %863 = vsyncpa [#allocation3], 1
    %s864 = scalar_lea.sflag [#allocation3], 1
    %865 = vsyncpa %s864, 1

</llo_original>
